<compile_context>
chip_gen: v7x
topology: tpu7x:2x2x1
jax: 0.10.0
libtpu: 0.0.40
codegen_flags: <defaults>
</compile_context>

<pallas_src>
import math
from itertools import combinations

import numpy as np
import jax
import jax.numpy as jnp
from jax.experimental import pallas as pl
from jax.experimental.pallas import tpu as pltpu


# ----------------------------- configuration ---------------------------------

CFG = dict(
    n_agents=4,
    state_dim=16,          # int(np.prod(args.state_shape))
    rnn_hidden_dim=8,
    hypernet_embed=32,
    mixing_embed_dim=8,
    hidden_dims=[8, 4],    # ConceptInteractionModule hidden dims
    nary=[1, 2],
)


# ------------------------------- Pallas kernel --------------------------------

def make_qnam_kernel(layout, dims):
    """Build the kernel; `layout` maps param name -> (row_offset, rows, cols) in the slab."""
    F, E = dims["F"], dims["E"]
    H1W, H2W = dims["h1_w"], dims["h2_w"]

    def kernel(data_ref, slab_ref, out_ref):
        def W(name):
            off, r, c = layout[name]
            return slab_ref[off:off + r, :c]

        def bdot(a, b):
            # bf16 operands at native MXU rate; f32 accumulation.
            return jnp.dot(a.astype(jnp.bfloat16), b, preferred_element_type=jnp.float32)

        def mixed_act(z, n_elu):
            # lanes [0, n_elu) get ELU, the remaining lanes get ReLU, in one pass
            # (keeps the fused-dot LHS contiguous -> no lane concat).
            lane = jax.lax.broadcasted_iota(jnp.int32, z.shape, 1)
            neg = jnp.where(lane < n_elu, jnp.exp(z) - 1.0, 0.0)
            return jnp.where(z > 0.0, z, neg)

        data = data_ref[...]                               # (TB, 53) bf16: [aq | st | lat | 1]

        # ---- stage A: one fused input matmul, split at the 128-lane boundary ----
        z_lo = bdot(data, W("WA_lo"))                      # [ck(32) | cq(32) | pad]
        z_hi = bdot(data, W("WA_hi"))                      # [h1pre(80) | hb1pre(32) | pad]

        # ---- concept-interaction MLP fused with hyper_b_final tail ----
        c1_in = mixed_act(z_hi[:, :H1W + E], H1W)          # [elu(h1) | relu(hb1)]
        z_c1 = bdot(c1_in, W("WC1")) + W("bC1").astype(jnp.float32)
        c2_in = mixed_act(z_c1, H2W)                       # [elu(h2) | relu(hb2)]
        z_c2 = bdot(c2_in, W("WC2")) + W("bC2").astype(jnp.float32)
        out_nn = z_c2[:, :F]                               # (TB, F)
        v = z_c2[:, F:F + 1]                               # (TB, 1)

        # ---- CentextAttention: fused [toqueries | tokeys] on [ck | cq] ----
        z_b = bdot(z_lo[:, :2 * E], W("WB"))               # [queries(F*F) | keys(F)]
        queries = z_b[:, :F * F]
        keys = jnp.maximum(z_b[:, F * F:F * F + F], 0.0)
        keys_exp = bdot(keys, W("T"))                      # broadcast keys[j] over row-groups i
        cw = bdot(queries * keys_exp, W("G"))              # (TB, F); 1/sqrt(F) folded into G

        # ---- softmax over F + weighted mix (keepdims all the way to the store) ----
        m = jnp.max(cw, axis=-1, keepdims=True)
        e = jnp.exp(cw - m)
        den = jnp.sum(e, axis=-1, keepdims=True)
        num = jnp.sum(out_nn * e, axis=-1, keepdims=True)
        # exact reciprocal: approx=True would stack ~1e-3 error on the bf16-dot error
        # budget, and the kernel is MXU-bound so EUP-vs-exact cost is irrelevant here.
        y = num * pl.reciprocal(den, approx=False) + v     # (TB, 1)
        out_ref[...] = y

    return kernel


# ----------------------------- parameter construction -------------------------------

def init_params(key, cfg):
    """Deterministic synthetic parameters matching the PyTorch module shapes."""
    n_agents = cfg["n_agents"]
    S, E, M = cfg["state_dim"], cfg["hypernet_embed"], cfg["mixing_embed_dim"]
    h1, h2 = cfg["hidden_dims"]

    nary_indices = {o: list(combinations(range(n_agents), o)) for o in cfg["nary"]}
    F = sum(len(v) for v in nary_indices.values())      # weight_in_feature_size

    def uni(key, shape, fan_in):
        bound = 1.0 / math.sqrt(max(fan_in, 1))
        return jax.random.uniform(key, shape, jnp.float32, -bound, bound)

    keys = iter(jax.random.split(key, 64))
    p = {"nary_indices": nary_indices, "F": F}

    # ConceptInteractionModule per order: per-group conv weights (Conv1d, k=1, groups=C)
    p["concepts"] = {}
    for order, combos in nary_indices.items():
        C = len(combos)
        p["concepts"][order] = dict(
            W1=uni(next(keys), (C, h1, order), order), b1=uni(next(keys), (C, h1), order),
            W2=uni(next(keys), (C, h2, h1), h1),       b2=uni(next(keys), (C, h2), h1),
            W3=uni(next(keys), (C, 1, h2), h2),        b3=uni(next(keys), (C, 1), h2),
        )

    # query / key embeddings
    p["Wq"] = uni(next(keys), (E, S), S);                       p["bq"] = uni(next(keys), (E,), S)
    p["Wk"] = uni(next(keys), (E, cfg["rnn_hidden_dim"] * n_agents), E)
    p["bk"] = uni(next(keys), (E,), E)

    # CentextAttention (no biases)
    p["Wtok"] = uni(next(keys), (F * 1, E), E)        # tokeys
    p["Wtoq"] = uni(next(keys), (F * F, E), E)        # toqueries

    # hyper_b_final: Linear(S,E) -> ReLU -> Linear(E,M) -> ReLU -> Linear(M,1)
    p["Hw1"] = uni(next(keys), (E, S), S); p["Hb1"] = uni(next(keys), (E,), S)
    p["Hw2"] = uni(next(keys), (M, E), E); p["Hb2"] = uni(next(keys), (M,), E)
    p["Hw3"] = uni(next(keys), (1, M), M); p["Hb3"] = uni(next(keys), (1,), M)
    return p


def _block_diag(blocks):
    R = sum(b.shape[0] for b in blocks)
    C = sum(b.shape[1] for b in blocks)
    out = np.zeros((R, C), np.float32)
    r = c = 0
    for b in blocks:
        out[r:r + b.shape[0], c:c + b.shape[1]] = b
        r += b.shape[0]
        c += b.shape[1]
    return out


def _pack_slab(sections, lane_width=128, row_align=16, dtype=jnp.bfloat16):
    """Pack 2-D param arrays into a single (rows, 128) bf16 slab; rows 16-aligned per section."""
    layout, blocks, off = {}, [], 0
    for name, arr in sections:
        arr = np.asarray(arr, np.float32)
        r, c = arr.shape
        assert c <= lane_width, (name, arr.shape)
        rp = -(-r // row_align) * row_align
        blk = np.zeros((rp, lane_width), np.float32)
        blk[:r, :c] = arr
        layout[name] = (off, r, c)
        blocks.append(blk)
        off += rp
    slab = jnp.asarray(np.concatenate(blocks, axis=0), dtype)
    return slab, layout


def prepare_qnam(params, cfg):
    """One-time parameter fusion + packing (do NOT call per forward)."""
    n_agents = cfg["n_agents"]
    S, E, M = cfg["state_dim"], cfg["hypernet_embed"], cfg["mixing_embed_dim"]
    L = cfg["rnn_hidden_dim"] * n_agents
    F = params["F"]

    # --- fuse both ConceptInteractionModules into block-diagonal chains (|W| applied) ---
    W1b, W2b, W3b, b1l, b2l, b3l, sel_cols = [], [], [], [], [], [], []
    for order in sorted(params["concepts"].keys()):
        cp = params["concepts"][order]
        C = cp["W1"].shape[0]
        for c in range(C):
            W1b.append(np.abs(np.asarray(cp["W1"][c])).T)   # (order, h1)
            W2b.append(np.abs(np.asarray(cp["W2"][c])).T)   # (h1, h2)
            W3b.append(np.abs(np.asarray(cp["W3"][c])).T)   # (h2, 1)
            sel_cols.extend(params["nary_indices"][order][c])
        b1l.append(np.asarray(cp["b1"]).reshape(-1))
        b2l.append(np.asarray(cp["b2"]).reshape(-1))
        b3l.append(np.asarray(cp["b3"]).reshape(-1))
    W1 = _block_diag(W1b)                                    # (16, 80)
    W2 = _block_diag(W2b)                                    # (80, 40)
    W3 = _block_diag(W3b)                                    # (40, 10)
    b1 = np.concatenate(b1l)
    b2 = np.concatenate(b2l)
    b3 = np.concatenate(b3l)
    H1W, H2W = W1.shape[1], W2.shape[1]                      # 80, 40

    # fold the n-ary gather into W1: x = aq @ Sel  (0/1 selector)  ->  SelW1 = Sel @ |W1|
    Sel = np.zeros((n_agents, W1.shape[0]), np.float32)
    for pos, a in enumerate(sel_cols):
        Sel[a, pos] = 1.0
    SelW1 = Sel @ W1                                         # (4, 80), exact rewrite

    Wq, bq = np.asarray(params["Wq"]), np.asarray(params["bq"])
    Wk, bk = np.asarray(params["Wk"]), np.asarray(params["bk"])
    Hw1, Hb1 = np.asarray(params["Hw1"]), np.asarray(params["Hb1"])
    Hw2, Hb2 = np.asarray(params["Hw2"]), np.asarray(params["Hb2"])
    Hw3, Hb3 = np.asarray(params["Hw3"]), np.asarray(params["Hb3"])
    Wtok, Wtoq = np.asarray(params["Wtok"]), np.asarray(params["Wtoq"])

    A = n_agents
    DATA_W = A + S + L + 1                                   # 53 (trailing constant-1 lane)
    one_row = A + S + L

    # --- stage A: fused (53 -> 2x128) weight, split at the 128-lane boundary ---
    # z_lo lanes: [ ck = lat@Wk^T + bk : 0..E | cq = st@Wq^T + bq : E..2E | 0 ]
    # z_hi lanes: [ h1pre = aq@SelW1 + b1 : 0..80 | hb1pre = st@Hw1^T + Hb1 : 80..112 | 0 ]
    WA_lo = np.zeros((DATA_W, 128), np.float32)
    WA_lo[A + S:A + S + L, 0:E] = Wk.T
    WA_lo[one_row, 0:E] = bk
    WA_lo[A:A + S, E:2 * E] = Wq.T
    WA_lo[one_row, E:2 * E] = bq

    WA_hi = np.zeros((DATA_W, 128), np.float32)
    WA_hi[0:A, 0:H1W] = SelW1
    WA_hi[one_row, 0:H1W] = b1
    WA_hi[A:A + S, H1W:H1W + E] = Hw1.T
    WA_hi[one_row, H1W:H1W + E] = Hb1

    # --- stage B: fused [toqueries | tokeys] on [ck | cq] ---
    WB = np.zeros((2 * E, F * F + F), np.float32)
    WB[E:2 * E, 0:F * F] = Wtoq.T                            # cq -> queries
    WB[0:E, F * F:F * F + F] = Wtok.T                        # ck -> keys

    # --- stage C1: fused [W2 | Hw2] on [elu(h1) | relu(hb1)] ---
    WC1 = np.zeros((H1W + E, H2W + M), np.float32)
    WC1[0:H1W, 0:H2W] = W2
    WC1[H1W:H1W + E, H2W:H2W + M] = Hw2.T
    bC1 = np.concatenate([b2, Hb2])[None, :]

    # --- stage C2: fused [W3 | Hw3] on [elu(h2) | relu(hb2)] ---
    WC2 = np.zeros((H2W + M, F + 1), np.float32)
    WC2[0:H2W, 0:F] = W3
    WC2[H2W:H2W + M, F:F + 1] = Hw3.T
    bC2 = np.concatenate([b3, Hb3])[None, :]

    # --- attention broadcast / grouped-sum constants (replace the per-lane bmm loop) ---
    T = np.zeros((F, F * F), np.float32)
    G = np.zeros((F * F, F), np.float32)
    nrm = 1.0 / math.sqrt(F)
    for i in range(F):
        for j in range(F):
            T[j, i * F + j] = 1.0
            G[i * F + j, i] = nrm

    sections = [("WA_lo", WA_lo), ("WA_hi", WA_hi), ("WB", WB),
                ("WC1", WC1), ("bC1", bC1), ("WC2", WC2), ("bC2", bC2),
                ("T", T), ("G", G)]
    slab, layout = _pack_slab(sections)                      # ~128 KiB bf16

    dims = dict(F=F, E=E, A=A, S=S, L=L, M=M, data_w=DATA_W, h1_w=H1W, h2_w=H2W)
    return slab, layout, dims


# ------------------------------- tiling helpers --------------------------------

def _round_up(x, m):
    return -(-x // m) * m


def _num_tensorcores():
    """v5e/v6e: 1 TensorCore per chip; v7x: 2 (fed via the 'parallel' grid axis)."""
    try:
        d = jax.devices()[0]
        kind = str(getattr(d, "device_kind", "")).lower()
        if "7x" in kind or "v7" in kind:
            return 2
        return max(1, int(getattr(d, "num_cores", 1)))
    except Exception:
        return 1


def _pick_tile(B, num_cores):
    """Single-TC chips: one maximal tile (grid splitting only adds ~0.35us/step and
    narrows stores). Multi-TC (v7x): >= 2 tiles so both cores get grid steps, with a
    larger row cap (VMEM is not the limiter at these widths)."""
    ALIGN = 16                       # bf16 sublane packing
    cap = 2048 if num_cores >= 2 else 1024
    if num_cores >= 2 and B > 2 * ALIGN:
        return min(cap, _round_up(_round_up(B, 2 * ALIGN) // 2, ALIGN))
    return min(cap, _round_up(B, ALIGN))


# --------------------------------- wrapper -----------------------------------------

def qnam_forward(slab, layout, dims, agent_qs, states, latent, cfg):
    bs, t, n_agents = agent_qs.shape
    B = bs * t

    aq = agent_qs.reshape(B, n_agents).astype(jnp.float32)
    st = states.reshape(B, dims["S"]).astype(jnp.float32)
    lat = latent.reshape(B, dims["L"]).astype(jnp.float32)
    ones = jnp.ones((B, 1), jnp.float32)
    # One contiguous per-row input slab. The n-ary gather is folded into the stage-A
    # weight (x = aq @ Sel) and the constant-1 lane folds the stage-A biases.
    data = jnp.concatenate([aq, st, lat, ones], axis=-1).astype(jnp.bfloat16)

    TB = _pick_tile(B, _num_tensorcores())
    num_tiles = pl.cdiv(B, TB)
    B_pad = num_tiles * TB
    if B_pad != B:
        data = jnp.pad(data, ((0, B_pad - B), (0, 0)))       # tail-only pad

    kernel = make_qnam_kernel(layout, dims)
    out = pl.pallas_call(
        kernel,
        out_shape=jax.ShapeDtypeStruct((B_pad, 1), jnp.float32),
        grid=(num_tiles,),
        in_specs=[
            pl.BlockSpec((TB, data.shape[1]), lambda i: (i, 0)),   # one lane-dense DMA per tile
            pl.BlockSpec(slab.shape, lambda i: (0, 0)),            # ~128 KiB params, constant block
        ],
        # (TB, 1) column store: the kernel is MXU-bound and the output is <0.4% of the
        # input bytes, so the masked column store is in the noise; keepdims math + this
        # store avoids the (TB,) -> (8, TB//8) relayout flagged in the perf review.
        out_specs=pl.BlockSpec((TB, 1), lambda i: (i, 0)),
        compiler_params=pltpu.CompilerParams(
            dimension_semantics=("parallel",),
            vmem_limit_bytes=(32 if TB <= 1024 else 64) * 1024 * 1024,
        ),
    )(data, slab)

    return out[:B].reshape(bs, t, 1)


# ------------------------------ pure-JAX reference ----------------------------------

def qnam_reference(p, agent_qs, states, latent, cfg):
    bs, t, n_agents = agent_qs.shape
    B = bs * t
    F = p["F"]
    aq = agent_qs.reshape(B, n_agents).astype(jnp.float32)
    st = states.reshape(B, cfg["state_dim"]).astype(jnp.float32)
    lat = latent.reshape(B, cfg["rnn_hidden_dim"] * n_agents).astype(jnp.float32)

    def elu(x):
        return jnp.where(x > 0, x, jnp.exp(x) - 1.0)

    outs = []
    for order in sorted(p["nary_indices"].keys()):
        idx = jnp.asarray(p["nary_indices"][order], dtype=jnp.int32)
        x = aq[:, idx]                                                 # (B, C, order)
        cp = p["concepts"][order]
        h = elu(jnp.einsum("bco,cho->bch", x, jnp.abs(cp["W1"])) + cp["b1"][None])
        h = elu(jnp.einsum("bci,chi->bch", h, jnp.abs(cp["W2"])) + cp["b2"][None])
        o = jnp.einsum("bci,chi->bch", h, jnp.abs(cp["W3"])) + cp["b3"][None]
        outs.append(o[..., 0])
    out_nn = jnp.concatenate(outs, axis=-1)                            # (B, F)

    cq = st @ p["Wq"].T + p["bq"]
    ck = lat @ p["Wk"].T + p["bk"]
    keys = jnp.maximum(ck @ p["Wtok"].T, 0.0)                          # (B, F)
    queries = (cq @ p["Wtoq"].T).reshape(B, F, F)
    cw = jnp.einsum("bij,bj->bi", queries, keys) / math.sqrt(F)
    w = jax.nn.softmax(cw, axis=-1)

    h = jnp.maximum(st @ p["Hw1"].T + p["Hb1"], 0.0)
    h = jnp.maximum(h @ p["Hw2"].T + p["Hb2"], 0.0)
    v = h @ p["Hw3"].T + p["Hb3"]                                      # (B, 1)

    y = jnp.sum(out_nn * w, axis=-1, keepdims=True) + v
    return y.reshape(bs, t, 1)


# ------------------------------------ main -------------------------------------------

if __name__ == "__main__":
    key = jax.random.PRNGKey(0)
    k_param, k_q, k_s, k_l = jax.random.split(key, 4)

    params = init_params(k_param, CFG)
    slab, layout, dims = prepare_qnam(params, CFG)     # one-time fusion/packing

    bs, t = 2, 4
    agent_qs = jax.random.normal(k_q, (bs, t, CFG["n_agents"]), jnp.float32)
    states = jax.random.normal(k_s, (bs, t, CFG["state_dim"]), jnp.float32)
    latent = jax.random.normal(
        k_l, (bs, t, CFG["n_agents"], CFG["rnn_hidden_dim"]), jnp.float32
    )

    q_tot = qnam_forward(slab, layout, dims, agent_qs, states, latent, CFG)
    q_tot = jax.block_until_ready(q_tot)

    q_ref = qnam_reference(params, agent_qs, states, latent, CFG)
    # bf16 matmul operands (f32 accumulation): tolerance sized to the bf16 error
    # budget; observed error at these magnitudes is a few 1e-3.
    np.testing.assert_allclose(np.asarray(q_tot), np.asarray(q_ref), rtol=1e-2, atol=1e-2)

    print("KERNEL_OK")
</pallas_src>

<mosaic_0001>
module attributes {stable_mosaic.version = 11 : i64} {
  func.func @kernel(%arg0: i32, %arg1: memref<16x53xbf16, #tpu.memory_space<vmem>>, %arg2: memref<512x128xbf16, #tpu.memory_space<vmem>>, %arg3: memref<16x1xf32, #tpu.memory_space<vmem>>) attributes {dimension_semantics = [#tpu.dimension_semantics<parallel>], iteration_bounds = array<i64: 1>, scalar_prefetch = 0 : i64, scratch_operands = 0 : i64, tpu.core_type = #tpu.core_type<tc>, window_params = [{transform_indices = @transform_0, window_bounds = array<i64: 16, 53>}, {pipeline_mode = #tpu.pipeline_mode<synchronous>, transform_indices = @transform_1, window_bounds = array<i64: 512, 128>}, {transform_indices = @transform_2, window_bounds = array<i64: 16, 1>}]} {
    %c0 = arith.constant 0 : index
    %c0_0 = arith.constant 0 : index
    %0 = vector.load %arg1[%c0, %c0_0] : memref<16x53xbf16, #tpu.memory_space<vmem>>, vector<16x53xbf16>
    %c0_1 = arith.constant 0 : index
    %c0_2 = arith.constant 0 : index
    %1 = vector.load %arg2[%c0_1, %c0_2] : memref<512x128xbf16, #tpu.memory_space<vmem>>, vector<53x128xbf16>
    %cst = arith.constant dense<0.000000e+00> : vector<16x128xf32>
    %2 = tpu.matmul %0, %1, %cst {dimension_numbers = #tpu.dot_dimension_numbers<[1], [0], [0], [1], [0, 0, 1, 1], [], []>} : vector<16x53xbf16>, vector<53x128xbf16>, vector<16x128xf32> -> vector<16x128xf32>
    %c64 = arith.constant 64 : index
    %c0_3 = arith.constant 0 : index
    %3 = vector.load %arg2[%c64, %c0_3] : memref<512x128xbf16, #tpu.memory_space<vmem>>, vector<53x128xbf16>
    %cst_4 = arith.constant dense<0.000000e+00> : vector<16x128xf32>
    %4 = tpu.matmul %0, %3, %cst_4 {dimension_numbers = #tpu.dot_dimension_numbers<[1], [0], [0], [1], [0, 0, 1, 1], [], []>} : vector<16x53xbf16>, vector<53x128xbf16>, vector<16x128xf32> -> vector<16x128xf32>
    %5 = vector.extract_strided_slice %4 {offsets = [0, 0], sizes = [16, 112], strides = [1, 1]} : vector<16x128xf32> to vector<16x112xf32>
    %6 = tpu.iota {dimensions = array<i32: 1>} : vector<16x112xi32>
    %c80_i32 = arith.constant 80 : i32
    %7 = vector.broadcast %c80_i32 : i32 to vector<16x112xi32>
    %8 = arith.cmpi slt, %6, %7 : vector<16x112xi32>
    %9 = math.exp %5 : vector<16x112xf32>
    %cst_5 = arith.constant 1.000000e+00 : f32
    %10 = vector.broadcast %cst_5 : f32 to vector<16x112xf32>
    %11 = arith.subf %9, %10 : vector<16x112xf32>
    %cst_6 = arith.constant 0.000000e+00 : f32
    %12 = vector.broadcast %cst_6 : f32 to vector<16x112xf32>
    %13 = arith.select %8, %11, %12 : vector<16x112xi1>, vector<16x112xf32>
    %cst_7 = arith.constant 0.000000e+00 : f32
    %14 = vector.broadcast %cst_7 : f32 to vector<16x112xf32>
    %15 = arith.cmpf ogt, %5, %14 : vector<16x112xf32>
    %16 = arith.select %15, %5, %13 : vector<16x112xi1>, vector<16x112xf32>
    %c192 = arith.constant 192 : index
    %c0_8 = arith.constant 0 : index
    %17 = vector.load %arg2[%c192, %c0_8] : memref<512x128xbf16, #tpu.memory_space<vmem>>, vector<112x48xbf16>
    %18 = arith.truncf %16 : vector<16x112xf32> to vector<16x112xbf16>
    %cst_9 = arith.constant dense<0.000000e+00> : vector<16x48xf32>
    %19 = tpu.matmul %18, %17, %cst_9 {dimension_numbers = #tpu.dot_dimension_numbers<[1], [0], [0], [1], [0, 0, 1, 1], [], []>} : vector<16x112xbf16>, vector<112x48xbf16>, vector<16x48xf32> -> vector<16x48xf32>
    %c304 = arith.constant 304 : index
    %c0_10 = arith.constant 0 : index
    %20 = vector.load %arg2[%c304, %c0_10] : memref<512x128xbf16, #tpu.memory_space<vmem>>, vector<1x48xbf16>
    %21 = arith.extf %20 : vector<1x48xbf16> to vector<1x48xf32>
    %22 = vector.broadcast %21 : vector<1x48xf32> to vector<16x48xf32>
    %23 = arith.addf %19, %22 : vector<16x48xf32>
    %24 = tpu.iota {dimensions = array<i32: 1>} : vector<16x48xi32>
    %c40_i32 = arith.constant 40 : i32
    %25 = vector.broadcast %c40_i32 : i32 to vector<16x48xi32>
    %26 = arith.cmpi slt, %24, %25 : vector<16x48xi32>
    %27 = math.exp %23 : vector<16x48xf32>
    %cst_11 = arith.constant 1.000000e+00 : f32
    %28 = vector.broadcast %cst_11 : f32 to vector<16x48xf32>
    %29 = arith.subf %27, %28 : vector<16x48xf32>
    %cst_12 = arith.constant 0.000000e+00 : f32
    %30 = vector.broadcast %cst_12 : f32 to vector<16x48xf32>
    %31 = arith.select %26, %29, %30 : vector<16x48xi1>, vector<16x48xf32>
    %cst_13 = arith.constant 0.000000e+00 : f32
    %32 = vector.broadcast %cst_13 : f32 to vector<16x48xf32>
    %33 = arith.cmpf ogt, %23, %32 : vector<16x48xf32>
    %34 = arith.select %33, %23, %31 : vector<16x48xi1>, vector<16x48xf32>
    %c320 = arith.constant 320 : index
    %c0_14 = arith.constant 0 : index
    %35 = vector.load %arg2[%c320, %c0_14] : memref<512x128xbf16, #tpu.memory_space<vmem>>, vector<48x11xbf16>
    %36 = arith.truncf %34 : vector<16x48xf32> to vector<16x48xbf16>
    %cst_15 = arith.constant dense<0.000000e+00> : vector<16x11xf32>
    %37 = tpu.matmul %36, %35, %cst_15 {dimension_numbers = #tpu.dot_dimension_numbers<[1], [0], [0], [1], [0, 0, 1, 1], [], []>} : vector<16x48xbf16>, vector<48x11xbf16>, vector<16x11xf32> -> vector<16x11xf32>
    %c368 = arith.constant 368 : index
    %c0_16 = arith.constant 0 : index
    %38 = vector.load %arg2[%c368, %c0_16] : memref<512x128xbf16, #tpu.memory_space<vmem>>, vector<1x11xbf16>
    %39 = arith.extf %38 : vector<1x11xbf16> to vector<1x11xf32>
    %40 = vector.broadcast %39 : vector<1x11xf32> to vector<16x11xf32>
    %41 = arith.addf %37, %40 : vector<16x11xf32>
    %42 = vector.extract_strided_slice %41 {offsets = [0, 0], sizes = [16, 10], strides = [1, 1]} : vector<16x11xf32> to vector<16x10xf32>
    %43 = vector.extract_strided_slice %41 {offsets = [0, 10], sizes = [16, 1], strides = [1, 1]} : vector<16x11xf32> to vector<16x1xf32>
    %44 = vector.extract_strided_slice %2 {offsets = [0, 0], sizes = [16, 64], strides = [1, 1]} : vector<16x128xf32> to vector<16x64xf32>
    %c128 = arith.constant 128 : index
    %c0_17 = arith.constant 0 : index
    %45 = vector.load %arg2[%c128, %c0_17] : memref<512x128xbf16, #tpu.memory_space<vmem>>, vector<64x110xbf16>
    %46 = arith.truncf %44 : vector<16x64xf32> to vector<16x64xbf16>
    %cst_18 = arith.constant dense<0.000000e+00> : vector<16x110xf32>
    %47 = tpu.matmul %46, %45, %cst_18 {dimension_numbers = #tpu.dot_dimension_numbers<[1], [0], [0], [1], [0, 0, 1, 1], [], []>} : vector<16x64xbf16>, vector<64x110xbf16>, vector<16x110xf32> -> vector<16x110xf32>
    %48 = vector.extract_strided_slice %47 {offsets = [0, 0], sizes = [16, 100], strides = [1, 1]} : vector<16x110xf32> to vector<16x100xf32>
    %49 = vector.extract_strided_slice %47 {offsets = [0, 100], sizes = [16, 10], strides = [1, 1]} : vector<16x110xf32> to vector<16x10xf32>
    %cst_19 = arith.constant 0.000000e+00 : f32
    %50 = vector.broadcast %cst_19 : f32 to vector<16x10xf32>
    %51 = arith.maximumf %49, %50 : vector<16x10xf32>
    %c384 = arith.constant 384 : index
    %c0_20 = arith.constant 0 : index
    %52 = vector.load %arg2[%c384, %c0_20] : memref<512x128xbf16, #tpu.memory_space<vmem>>, vector<10x100xbf16>
    %53 = arith.truncf %51 : vector<16x10xf32> to vector<16x10xbf16>
    %cst_21 = arith.constant dense<0.000000e+00> : vector<16x100xf32>
    %54 = tpu.matmul %53, %52, %cst_21 {dimension_numbers = #tpu.dot_dimension_numbers<[1], [0], [0], [1], [0, 0, 1, 1], [], []>} : vector<16x10xbf16>, vector<10x100xbf16>, vector<16x100xf32> -> vector<16x100xf32>
    %55 = arith.mulf %48, %54 : vector<16x100xf32>
    %c400 = arith.constant 400 : index
    %c0_22 = arith.constant 0 : index
    %56 = vector.load %arg2[%c400, %c0_22] : memref<512x128xbf16, #tpu.memory_space<vmem>>, vector<100x10xbf16>
    %57 = arith.truncf %55 : vector<16x100xf32> to vector<16x100xbf16>
    %cst_23 = arith.constant dense<0.000000e+00> : vector<16x10xf32>
    %58 = tpu.matmul %57, %56, %cst_23 {dimension_numbers = #tpu.dot_dimension_numbers<[1], [0], [0], [1], [0, 0, 1, 1], [], []>} : vector<16x100xbf16>, vector<100x10xbf16>, vector<16x10xf32> -> vector<16x10xf32>
    %cst_24 = arith.constant dense<0xFF800000> : vector<16xf32>
    %59 = vector.multi_reduction <maximumf>, %58, %cst_24 [1] : vector<16x10xf32> to vector<16xf32>
    %60 = vector.shape_cast %59 : vector<16xf32> to vector<16x1xf32>
    %61 = vector.broadcast %60 : vector<16x1xf32> to vector<16x10xf32>
    %62 = arith.subf %58, %61 : vector<16x10xf32>
    %63 = math.exp %62 : vector<16x10xf32>
    %cst_25 = arith.constant dense<0.000000e+00> : vector<16xf32>
    %64 = vector.multi_reduction <add>, %63, %cst_25 [1] : vector<16x10xf32> to vector<16xf32>
    %65 = vector.shape_cast %64 : vector<16xf32> to vector<16x1xf32>
    %66 = arith.mulf %42, %63 : vector<16x10xf32>
    %cst_26 = arith.constant dense<0.000000e+00> : vector<16xf32>
    %67 = vector.multi_reduction <add>, %66, %cst_26 [1] : vector<16x10xf32> to vector<16xf32>
    %68 = vector.shape_cast %67 : vector<16xf32> to vector<16x1xf32>
    %69 = tpu.reciprocal %65 : vector<16x1xf32> -> vector<16x1xf32>
    %70 = arith.mulf %68, %69 : vector<16x1xf32>
    %71 = arith.addf %70, %43 : vector<16x1xf32>
    %c0_27 = arith.constant 0 : index
    %c0_28 = arith.constant 0 : index
    %72 = vector.load %arg3[%c0_27, %c0_28] : memref<16x1xf32, #tpu.memory_space<vmem>>, vector<16x1xf32>
    tpu.vector_store %arg3[%c0_27, %c0_28], %71 {strides = array<i32>} : memref<16x1xf32, #tpu.memory_space<vmem>>, vector<16x1xf32>,
    return
  }
  func.func @transform_0(%arg0: i32) -> (i32, i32) {
    %c0_i32 = arith.constant 0 : i32
    %c0_i32_0 = arith.constant 0 : i32
    return %arg0, %c0_i32 : i32, i32
  }
  func.func @transform_1(%arg0: i32) -> (i32, i32) {
    %c0_i32 = arith.constant 0 : i32
    %c0_i32_0 = arith.constant 0 : i32
    %c0_i32_1 = arith.constant 0 : i32
    return %c0_i32, %c0_i32_0 : i32, i32
  }
  func.func @transform_2(%arg0: i32) -> (i32, i32) {
    %c0_i32 = arith.constant 0 : i32
    %c0_i32_0 = arith.constant 0 : i32
    return %arg0, %c0_i32 : i32, i32
  }
}

</mosaic_0001>

<llo_original>
// kernel: tpu_custom_call.1
$region0: #{tpu_custom_call.1}
  #allocation0 [shape = 'u32[]', space=smem, size = 0x4, offset = 0x4, fixed_abs, tag = 'smem constant byte address 0x4 - core index']
  #allocation1 [shape = 'u32[144,128]{1,0:T(1,128)}', space=vmem, size = 0x12000, scoped, tag = 'internal scratch']
  %s0 = inlined_call_operand.hbm [shape: bf16[16,53], index: 0, kind: input, shape index: {}]
  %s1 = inlined_call_operand.hbm [shape: bf16[512,128], index: 1, kind: input, shape index: {}]
  %s2 = inlined_call_operand.vmem [shape: f32[16,1], index: 2, kind: output, shape index: {}]
  %s3 = sld [smem:[#allocation0]]
  $region26: #{tpu_custom_call.1} parent=0
    _
  %s5 = ssub.s32 1, %s3
  %s6 = scalar_select 0, %s5, %s3
  $region1: #{tpu_custom_call.1} parent=0
    #allocation2 [shape = 'u8[4096]{0}', space=vmem, size = 0x1000, scoped, tag = 'input window, operand 0, single buffered']
    #allocation3 [shape = 's32[1]{0}', space=sflag, size = 0x4, scoped, tag = 'scoped memory for tpu_custom_call.1']
    #allocation4 [shape = 'u8[131072]{0}', space=vmem, size = 0x20000, scoped, tag = 'input window, operand 1, single buffered']
    #allocation5 [shape = 's32[1]{0}', space=sflag, size = 0x4, scoped, tag = 'scoped memory for tpu_custom_call.1']
    %7 = vsyncpa [#allocation3], 0
    %8 = vsyncpa [#allocation5], 0
    // Predicated region
    $region2: #{tpu_custom_call.1} parent=1 // pred_check
      _
    $region3: #{tpu_custom_call.1} parent=1 // pred_check_branch
      %10 = sbr.rel (0) target = $region5
    $region4: #{tpu_custom_call.1} parent=1 // pred_region
      %s12 = ssub.s32 128, 128
      %13 = vsyncadd [#allocation3], %s12
      %s14 = sshll.u32 [#allocation2], 4
      %s15 = int_to_ptr.vmem [resolvable:$true] %s14
      %20 = dma.hbm_to_vmem [thread:$0]  %s0, 128, %s15, [#allocation3], 64, 64, 4
    $region5: #{tpu_custom_call.1} parent=1 // pred_fallthru
      _
    // Predicated region
    $region6: #{tpu_custom_call.1} parent=1 // pred_check
      _
    $region7: #{tpu_custom_call.1} parent=1 // pred_check_branch
      %22 = sbr.rel (0) target = $region9
    $region8: #{tpu_custom_call.1} parent=1 // pred_region
      %s24 = ssub.s32 4096, 4096
      %25 = vsyncadd [#allocation5], %s24
      %s26 = sshll.u32 [#allocation4], 4
      %s27 = int_to_ptr.vmem [resolvable:$true] %s26
      %32 = dma.hbm_to_vmem [thread:$0]  %s1, 4096, %s27, [#allocation5], 64, 64, 4
    $region9: #{tpu_custom_call.1} parent=1 // pred_fallthru
      _
    // Predicated region
    $region10: #{tpu_custom_call.1} parent=1 // pred_check
      _
    $region11: #{tpu_custom_call.1} parent=1 // pred_check_branch
      %34 = sbr.rel (0) target = $region13
    $region12: #{tpu_custom_call.1} parent=1 // pred_region
      %35 = dma.done [#allocation3], 128
    $region13: #{tpu_custom_call.1} parent=1 // pred_fallthru
      _
    // Predicated region
    $region14: #{tpu_custom_call.1} parent=1 // pred_check
      _
    $region15: #{tpu_custom_call.1} parent=1 // pred_check_branch
      %37 = sbr.rel (0) target = $region17
    $region16: #{tpu_custom_call.1} parent=1 // pred_region
      %38 = dma.done [#allocation5], 4096
    $region17: #{tpu_custom_call.1} parent=1 // pred_fallthru
      _
    %v40 = vld [vmem:[#allocation2] sm:$0xf]
    %v41 = vld [vmem:[#allocation2 + $0x4] sm:$0xf]
    %v42 = vld [vmem:[#allocation4] sm:$0xf]
    %v43 = vld [vmem:[#allocation4 + $0x4] sm:$0xf]
    %v44 = vld [vmem:[#allocation4 + $0x8] sm:$0xf]
    %v45 = vld [vmem:[#allocation4 + $0xc] sm:$0xf]
    %v46 = vld [vmem:[#allocation4 + $0x10] sm:$0xf]
    %v47 = vld [vmem:[#allocation4 + $0x14] sm:$0xf]
    %v48 = vld [vmem:[#allocation4 + $0x18] sm:$0x7]
    %v51 = vunpack.c.l.b16 %v40
    %v52 = vunpack.c.l.b16 %v41
    %v53 = vpack.c.b16 %v52, %v51
    %v61 = vunpack.c.l.b16 %v42
    %v62 = vunpack.c.l.b16 %v43
    %v63 = vunpack.c.l.b16 %v44
    %v64 = vunpack.c.l.b16 %v45
    %v65 = vunpack.c.l.b16 %v46
    %v66 = vunpack.c.l.b16 %v47
    %v67 = vunpack.c.l.b16 %v48
    %v68 = vpack.c.b16 %v62, %v61
    %v69 = vpack.c.b16 %v64, %v63
    %v70 = vpack.c.b16 %v66, %v65
    %v71 = vpack.c.b16 %v67, %v67
    %vm75 = vcmask 433152
    %v77 = vsel %vm75, %v53, 0
    %vm79 = vcmask 1041408
    %vm80 = vcmask 1042432
    %v81 = vsel %vm79, 4294967295, 65535
    %v82 = vsel %vm80, %v81, 0
    %v84 = vand.u32 %v71, %v82
    %86 = vmatprep.subr.bf16.mxu0 0
    %87 = vmatpush1.bf16.msra.mxu0 %v68
    %88 = vmatprep.subr.bf16.mxu0 0
    %89 = vmatpush1.bf16.msra.mxu0 %v69
    %90 = vmatprep.subr.bf16.mxu0 0
    %91 = vmatpush1.bf16.msra.mxu0 %v70
    %92 = vmatprep.subr.bf16.mxu0 0
    %93 = vmatpush1.bf16.msra.mxu0 %v84
    %94 = vmatprep.subr.bf16.mxu0 0
    %95 = vmatpush1.bf16.msra.mxu0 0
    %96 = vmatprep.subr.bf16.mxu0 0
    %97 = vmatpush1.bf16.msra.mxu0 0
    %98 = vmatprep.subr.bf16.mxu0 0
    %99 = vmatpush1.bf16.msra.mxu0 0
    %100 = vmatprep.subr.bf16.mxu0 0
    %101 = vmatpush1.bf16.msra.mxu0 0
    %102 = vmatprep.subr.bf16.mxu0 0
    %103 = vmatpush1.bf16.msra.mxu0 0
    %104 = vmatprep.subr.bf16.mxu0 0
    %105 = vmatpush1.bf16.msra.mxu0 0
    %106 = vmatprep.subr.bf16.mxu0 0
    %107 = vmatpush1.bf16.msra.mxu0 0
    %108 = vmatprep.subr.bf16.mxu0 0
    %109 = vmatpush1.bf16.msra.mxu0 0
    %110 = vmatprep.subr.bf16.mxu0 0
    %111 = vmatpush1.bf16.msra.mxu0 0
    %112 = vmatprep.subr.bf16.mxu0 0
    %113 = vmatpush1.bf16.msra.mxu0 0
    %114 = vmatprep.subr.bf16.mxu0 0
    %115 = vmatpush1.bf16.msra.mxu0 0
    %116 = vmatprep.subr.bf16.mxu0 0
    %117 = vmatpush1.bf16.msra.mxu0 0
    %118 = vmatprep.mubr.bf16.mxu0 0
    %119 = vmatmul.mubr.bf16.gmra.mrb[0].mxu0 %v77
    %v120 = vpop.f32.mrb[0].mxu0
    %v121 = vadd.f32 0.0, %v120
    %v122 = vpop.f32.mrb[0].mxu0
    %v123 = vpop.f32.mrb[0].mxu0
    %v124 = vadd.f32 0.0, %v123
    %v125 = vpop.f32.mrb[0].mxu0
    %126 = vdwg.mxu0
    %v127 = vld [vmem:[#allocation4 + $0x20] sm:$0xf]
    %v128 = vld [vmem:[#allocation4 + $0x24] sm:$0xf]
    %v129 = vld [vmem:[#allocation4 + $0x28] sm:$0xf]
    %v130 = vld [vmem:[#allocation4 + $0x2c] sm:$0xf]
    %v131 = vld [vmem:[#allocation4 + $0x30] sm:$0xf]
    %v132 = vld [vmem:[#allocation4 + $0x34] sm:$0xf]
    %v133 = vld [vmem:[#allocation4 + $0x38] sm:$0x7]
    %v141 = vunpack.c.l.b16 %v127
    %v142 = vunpack.c.l.b16 %v128
    %v143 = vunpack.c.l.b16 %v129
    %v144 = vunpack.c.l.b16 %v130
    %v145 = vunpack.c.l.b16 %v131
    %v146 = vunpack.c.l.b16 %v132
    %v147 = vunpack.c.l.b16 %v133
    %v148 = vpack.c.b16 %v142, %v141
    %v149 = vpack.c.b16 %v144, %v143
    %v150 = vpack.c.b16 %v146, %v145
    %v151 = vpack.c.b16 %v147, %v147
    %v156 = vand.u32 %v151, %v82
    %158 = vmatprep.subr.bf16.mxu0 0
    %159 = vmatpush1.bf16.msra.mxu0 %v148
    %160 = vmatprep.subr.bf16.mxu0 0
    %161 = vmatpush1.bf16.msra.mxu0 %v149
    %162 = vmatprep.subr.bf16.mxu0 0
    %163 = vmatpush1.bf16.msra.mxu0 %v150
    %164 = vmatprep.subr.bf16.mxu0 0
    %165 = vmatpush1.bf16.msra.mxu0 %v156
    %166 = vmatprep.subr.bf16.mxu0 0
    %167 = vmatpush1.bf16.msra.mxu0 0
    %168 = vmatprep.subr.bf16.mxu0 0
    %169 = vmatpush1.bf16.msra.mxu0 0
    %170 = vmatprep.subr.bf16.mxu0 0
    %171 = vmatpush1.bf16.msra.mxu0 0
    %172 = vmatprep.subr.bf16.mxu0 0
    %173 = vmatpush1.bf16.msra.mxu0 0
    %174 = vmatprep.subr.bf16.mxu0 0
    %175 = vmatpush1.bf16.msra.mxu0 0
    %176 = vmatprep.subr.bf16.mxu0 0
    %177 = vmatpush1.bf16.msra.mxu0 0
    %178 = vmatprep.subr.bf16.mxu0 0
    %179 = vmatpush1.bf16.msra.mxu0 0
    %180 = vmatprep.subr.bf16.mxu0 0
    %181 = vmatpush1.bf16.msra.mxu0 0
    %182 = vmatprep.subr.bf16.mxu0 0
    %183 = vmatpush1.bf16.msra.mxu0 0
    %184 = vmatprep.subr.bf16.mxu0 0
    %185 = vmatpush1.bf16.msra.mxu0 0
    %186 = vmatprep.subr.bf16.mxu0 0
    %187 = vmatpush1.bf16.msra.mxu0 0
    %188 = vmatprep.subr.bf16.mxu0 0
    %189 = vmatpush1.bf16.msra.mxu0 0
    %190 = vmatprep.mubr.bf16.mxu0 0
    %191 = vmatmul.mubr.bf16.gmra.mrb[0].mxu0 %v77
    %v192 = vpop.f32.mrb[0].mxu0
    %v193 = vadd.f32 0.0, %v192
    %v194 = vpop.f32.mrb[0].mxu0
    %v195 = vpop.f32.mrb[0].mxu0
    %v196 = vadd.f32 0.0, %v195
    %v197 = vpop.f32.mrb[0].mxu0
    %198 = vdwg.mxu0
    %v199 = vlaneseq
    %v200 = vand.u32 %v199, 127
    %vm201 = vcmp.lt.s32.totalorder %v200, 80
    %v202 = vmul.f32 %v193, 1.442695
    %v203 = vpow.pop %v202
    %v204 = vmul.f32 %v196, 1.442695
    %v205 = vpow.pop %v204
    %v206 = vsub.f32 %v203, 1.0
    %v207 = vsub.f32 %v205, 1.0
    %v208 = vsel %vm201, %v206, 0.0
    %v209 = vsel %vm201, %v207, 0.0
    %vm210 = vcmp.gt.f32.partialorder %v193, 0.0
    %vm211 = vcmp.gt.f32.partialorder %v196, 0.0
    %v212 = vsel %vm210, %v193, %v208
    %v213 = vsel %vm211, %v196, %v209
    %v214 = vld [vmem:[#allocation4 + $0x60] sm:$0xf]
    %v215 = vld [vmem:[#allocation4 + $0x64] sm:$0xf]
    %v216 = vld [vmem:[#allocation4 + $0x68] sm:$0xf]
    %v217 = vld [vmem:[#allocation4 + $0x6c] sm:$0xf]
    %v218 = vld [vmem:[#allocation4 + $0x70] sm:$0xf]
    %v219 = vld [vmem:[#allocation4 + $0x74] sm:$0xf]
    %v220 = vld [vmem:[#allocation4 + $0x78] sm:$0xf]
    %v221 = vld [vmem:[#allocation4 + $0x7c] sm:$0xf]
    %v222 = vld [vmem:[#allocation4 + $0x80] sm:$0xf]
    %v223 = vld [vmem:[#allocation4 + $0x84] sm:$0xf]
    %v224 = vld [vmem:[#allocation4 + $0x88] sm:$0xf]
    %v225 = vld [vmem:[#allocation4 + $0x8c] sm:$0xf]
    %v226 = vld [vmem:[#allocation4 + $0x90] sm:$0xf]
    %v227 = vld [vmem:[#allocation4 + $0x94] sm:$0xf]
    %v228 = vpack.c.bf16 %v213, %v212
    %v229 = vld [vmem:[#allocation4 + $0x98] sm:$0x1]
    %v230 = vunpack.c.l.bf16 %v229
    %v231 = vlaneseq
    %v232 = vshrl.u32 %v231, 7
    %v233 = vsub.s32 0, %v232
    %v234 = vrot.slane %v230, %v233
    %v249 = vunpack.c.l.b16 %v214
    %v250 = vunpack.c.l.b16 %v215
    %v251 = vunpack.c.l.b16 %v216
    %v252 = vunpack.c.l.b16 %v217
    %v253 = vunpack.c.l.b16 %v218
    %v254 = vunpack.c.l.b16 %v219
    %v255 = vunpack.c.l.b16 %v220
    %v256 = vunpack.c.l.b16 %v221
    %v257 = vunpack.c.l.b16 %v222
    %v258 = vunpack.c.l.b16 %v223
    %v259 = vunpack.c.l.b16 %v224
    %v260 = vunpack.c.l.b16 %v225
    %v261 = vunpack.c.l.b16 %v226
    %v262 = vunpack.c.l.b16 %v227
    %v263 = vpack.c.b16 %v250, %v249
    %v264 = vpack.c.b16 %v252, %v251
    %v265 = vpack.c.b16 %v254, %v253
    %v266 = vpack.c.b16 %v256, %v255
    %v267 = vpack.c.b16 %v258, %v257
    %v268 = vpack.c.b16 %v260, %v259
    %v269 = vpack.c.b16 %v262, %v261
    %vm277 = vcmask 916480
    %v279 = vsel %vm277, %v228, 0
    %281 = vmatprep.subr.bf16.mxu0 0
    %282 = vmatpush1.bf16.msra.mxu0 %v263
    %283 = vmatprep.subr.bf16.mxu0 0
    %284 = vmatpush1.bf16.msra.mxu0 %v264
    %285 = vmatprep.subr.bf16.mxu0 0
    %286 = vmatpush1.bf16.msra.mxu0 %v265
    %287 = vmatprep.subr.bf16.mxu0 0
    %288 = vmatpush1.bf16.msra.mxu0 %v266
    %289 = vmatprep.subr.bf16.mxu0 0
    %290 = vmatpush1.bf16.msra.mxu0 %v267
    %291 = vmatprep.subr.bf16.mxu0 0
    %292 = vmatpush1.bf16.msra.mxu0 %v268
    %293 = vmatprep.subr.bf16.mxu0 0
    %294 = vmatpush1.bf16.msra.mxu0 %v269
    %295 = vmatprep.subr.bf16.mxu0 0
    %296 = vmatpush1.bf16.msra.mxu0 0
    %297 = vmatprep.subr.bf16.mxu0 0
    %298 = vmatpush1.bf16.msra.mxu0 0
    %299 = vmatprep.subr.bf16.mxu0 0
    %300 = vmatpush1.bf16.msra.mxu0 0
    %301 = vmatprep.subr.bf16.mxu0 0
    %302 = vmatpush1.bf16.msra.mxu0 0
    %303 = vmatprep.subr.bf16.mxu0 0
    %304 = vmatpush1.bf16.msra.mxu0 0
    %305 = vmatprep.subr.bf16.mxu0 0
    %306 = vmatpush1.bf16.msra.mxu0 0
    %307 = vmatprep.subr.bf16.mxu0 0
    %308 = vmatpush1.bf16.msra.mxu0 0
    %309 = vmatprep.subr.bf16.mxu0 0
    %310 = vmatpush1.bf16.msra.mxu0 0
    %311 = vmatprep.subr.bf16.mxu0 0
    %312 = vmatpush1.bf16.msra.mxu0 0
    %313 = vmatprep.mubr.bf16.mxu0 0
    %314 = vmatmul.mubr.bf16.gmra.mrb[0].mxu0 %v279
    %v315 = vpop.f32.mrb[0].mxu0
    %v316 = vadd.f32 %v234, %v315
    %v317 = vpop.f32.mrb[0].mxu0
    %v318 = vpop.f32.mrb[0].mxu0
    %v319 = vadd.f32 %v234, %v318
    %v320 = vpop.f32.mrb[0].mxu0
    %321 = vdwg.mxu0
    %vm322 = vcmp.lt.s32.totalorder %v200, 40
    %v323 = vmul.f32 %v316, 1.442695
    %v324 = vpow.pop %v323
    %v325 = vmul.f32 %v319, 1.442695
    %v326 = vpow.pop %v325
    %v327 = vsub.f32 %v324, 1.0
    %v328 = vsub.f32 %v326, 1.0
    %v329 = vsel %vm322, %v327, 0.0
    %v330 = vsel %vm322, %v328, 0.0
    %vm331 = vcmp.gt.f32.partialorder %v316, 0.0
    %vm332 = vcmp.gt.f32.partialorder %v319, 0.0
    %v333 = vsel %vm331, %v316, %v329
    %v334 = vsel %vm332, %v319, %v330
    %v335 = vld [vmem:[#allocation4 + $0xa0] sm:$0xf]
    %v336 = vld [vmem:[#allocation4 + $0xa4] sm:$0xf]
    %v337 = vld [vmem:[#allocation4 + $0xa8] sm:$0xf]
    %v338 = vld [vmem:[#allocation4 + $0xac] sm:$0xf]
    %v339 = vld [vmem:[#allocation4 + $0xb0] sm:$0xf]
    %v340 = vld [vmem:[#allocation4 + $0xb4] sm:$0xf]
    %v341 = vpack.c.bf16 %v334, %v333
    %v342 = vld [vmem:[#allocation4 + $0xb8] sm:$0x1]
    %v343 = vunpack.c.l.bf16 %v342
    %v344 = vlaneseq
    %v345 = vshrl.u32 %v344, 7
    %v346 = vsub.s32 0, %v345
    %v347 = vrot.slane %v343, %v346
    %v354 = vunpack.c.l.b16 %v335
    %v355 = vunpack.c.l.b16 %v336
    %v356 = vunpack.c.l.b16 %v337
    %v357 = vunpack.c.l.b16 %v338
    %v358 = vunpack.c.l.b16 %v339
    %v359 = vunpack.c.l.b16 %v340
    %v360 = vpack.c.b16 %v355, %v354
    %v361 = vpack.c.b16 %v357, %v356
    %v362 = vpack.c.b16 %v359, %v358
    %vm366 = vcmask 392192
    %v368 = vsel %vm366, %v341, 0
    %370 = vmatprep.subr.bf16.mxu0 0
    %371 = vmatpush1.bf16.msra.mxu0 %v360
    %372 = vmatprep.subr.bf16.mxu0 0
    %373 = vmatpush1.bf16.msra.mxu0 %v361
    %374 = vmatprep.subr.bf16.mxu0 0
    %375 = vmatpush1.bf16.msra.mxu0 %v362
    %376 = vmatprep.subr.bf16.mxu0 0
    %377 = vmatpush1.bf16.msra.mxu0 0
    %378 = vmatprep.subr.bf16.mxu0 0
    %379 = vmatpush1.bf16.msra.mxu0 0
    %380 = vmatprep.subr.bf16.mxu0 0
    %381 = vmatpush1.bf16.msra.mxu0 0
    %382 = vmatprep.subr.bf16.mxu0 0
    %383 = vmatpush1.bf16.msra.mxu0 0
    %384 = vmatprep.subr.bf16.mxu0 0
    %385 = vmatpush1.bf16.msra.mxu0 0
    %386 = vmatprep.subr.bf16.mxu0 0
    %387 = vmatpush1.bf16.msra.mxu0 0
    %388 = vmatprep.subr.bf16.mxu0 0
    %389 = vmatpush1.bf16.msra.mxu0 0
    %390 = vmatprep.subr.bf16.mxu0 0
    %391 = vmatpush1.bf16.msra.mxu0 0
    %392 = vmatprep.subr.bf16.mxu0 0
    %393 = vmatpush1.bf16.msra.mxu0 0
    %394 = vmatprep.subr.bf16.mxu0 0
    %395 = vmatpush1.bf16.msra.mxu0 0
    %396 = vmatprep.subr.bf16.mxu0 0
    %397 = vmatpush1.bf16.msra.mxu0 0
    %398 = vmatprep.subr.bf16.mxu0 0
    %399 = vmatpush1.bf16.msra.mxu0 0
    %400 = vmatprep.subr.bf16.mxu0 0
    %401 = vmatpush1.bf16.msra.mxu0 0
    %402 = vmatprep.mubr.bf16.mxu0 0
    %403 = vmatmul.mubr.bf16.gmra.mrb[0].mxu0 %v368
    %v404 = vpop.f32.mrb[0].mxu0
    %v405 = vadd.f32 %v347, %v404
    %v406 = vpop.f32.mrb[0].mxu0
    %v407 = vpop.f32.mrb[0].mxu0
    %v408 = vadd.f32 %v347, %v407
    %v409 = vpop.f32.mrb[0].mxu0
    %410 = vdwg.mxu0
    %v411 = vld [vmem:[#allocation4 + $0x40] sm:$0xf]
    %v412 = vld [vmem:[#allocation4 + $0x44] sm:$0xf]
    %v413 = vld [vmem:[#allocation4 + $0x48] sm:$0xf]
    %v414 = vld [vmem:[#allocation4 + $0x4c] sm:$0xf]
    %v415 = vld [vmem:[#allocation4 + $0x50] sm:$0xf]
    %v416 = vld [vmem:[#allocation4 + $0x54] sm:$0xf]
    %v417 = vld [vmem:[#allocation4 + $0x58] sm:$0xf]
    %v418 = vld [vmem:[#allocation4 + $0x5c] sm:$0xf]
    %v419 = vpack.c.bf16 %v124, %v121
    %v428 = vunpack.c.l.b16 %v411
    %v429 = vunpack.c.l.b16 %v412
    %v430 = vunpack.c.l.b16 %v413
    %v431 = vunpack.c.l.b16 %v414
    %v432 = vunpack.c.l.b16 %v415
    %v433 = vunpack.c.l.b16 %v416
    %v434 = vunpack.c.l.b16 %v417
    %v435 = vunpack.c.l.b16 %v418
    %v436 = vpack.c.b16 %v429, %v428
    %v437 = vpack.c.b16 %v431, %v430
    %v438 = vpack.c.b16 %v433, %v432
    %v439 = vpack.c.b16 %v435, %v434
    %vm444 = vcmask 523264
    %v446 = vsel %vm444, %v419, 0
    %448 = vmatprep.subr.bf16.mxu0 0
    %449 = vmatpush1.bf16.msra.mxu0 %v436
    %450 = vmatprep.subr.bf16.mxu0 0
    %451 = vmatpush1.bf16.msra.mxu0 %v437
    %452 = vmatprep.subr.bf16.mxu0 0
    %453 = vmatpush1.bf16.msra.mxu0 %v438
    %454 = vmatprep.subr.bf16.mxu0 0
    %455 = vmatpush1.bf16.msra.mxu0 %v439
    %456 = vmatprep.subr.bf16.mxu0 0
    %457 = vmatpush1.bf16.msra.mxu0 0
    %458 = vmatprep.subr.bf16.mxu0 0
    %459 = vmatpush1.bf16.msra.mxu0 0
    %460 = vmatprep.subr.bf16.mxu0 0
    %461 = vmatpush1.bf16.msra.mxu0 0
    %462 = vmatprep.subr.bf16.mxu0 0
    %463 = vmatpush1.bf16.msra.mxu0 0
    %464 = vmatprep.subr.bf16.mxu0 0
    %465 = vmatpush1.bf16.msra.mxu0 0
    %466 = vmatprep.subr.bf16.mxu0 0
    %467 = vmatpush1.bf16.msra.mxu0 0
    %468 = vmatprep.subr.bf16.mxu0 0
    %469 = vmatpush1.bf16.msra.mxu0 0
    %470 = vmatprep.subr.bf16.mxu0 0
    %471 = vmatpush1.bf16.msra.mxu0 0
    %472 = vmatprep.subr.bf16.mxu0 0
    %473 = vmatpush1.bf16.msra.mxu0 0
    %474 = vmatprep.subr.bf16.mxu0 0
    %475 = vmatpush1.bf16.msra.mxu0 0
    %476 = vmatprep.subr.bf16.mxu0 0
    %477 = vmatpush1.bf16.msra.mxu0 0
    %478 = vmatprep.subr.bf16.mxu0 0
    %479 = vmatpush1.bf16.msra.mxu0 0
    %480 = vmatprep.mubr.bf16.mxu0 0
    %481 = vmatmul.mubr.bf16.gmra.mrb[0].mxu0 %v446
    %v482 = vpop.f32.mrb[0].mxu0
    %v483 = vadd.f32 0.0, %v482
    %v484 = vpop.f32.mrb[0].mxu0
    %v485 = vpop.f32.mrb[0].mxu0
    %v486 = vadd.f32 0.0, %v485
    %v487 = vpop.f32.mrb[0].mxu0
    %488 = vdwg.mxu0
    %v489 = vmax.f32 %v483, 0.0
    %v490 = vmax.f32 %v486, 0.0
    %v491 = vld [vmem:[#allocation4 + $0xc0] sm:$0xf]
    %v492 = vld [vmem:[#allocation4 + $0xc4] sm:$0x1]
    %v493 = vpack.c.bf16 %v490, %v489
    %495 = vrot.lane.b32.xlu0 %v493, 28
    %v496 = vpop.permute.xlu0 %495
    %v499 = vunpack.c.l.b16 %v491
    %v500 = vunpack.c.l.b16 %v492
    %v501 = vpack.c.b16 %v500, %v499
    %vm502 = vcmask 80896
    %v504 = vsel %vm502, %v496, 0
    %vm506 = vcmask 1044480
    %v508 = vsel %vm506, %v501, 0
    %510 = vmatprep.subr.bf16.mxu0 0
    %511 = vmatpush1.bf16.msra.mxu0 %v508
    %512 = vmatprep.subr.bf16.mxu0 0
    %513 = vmatpush1.bf16.msra.mxu0 0
    %514 = vmatprep.subr.bf16.mxu0 0
    %515 = vmatpush1.bf16.msra.mxu0 0
    %516 = vmatprep.subr.bf16.mxu0 0
    %517 = vmatpush1.bf16.msra.mxu0 0
    %518 = vmatprep.subr.bf16.mxu0 0
    %519 = vmatpush1.bf16.msra.mxu0 0
    %520 = vmatprep.subr.bf16.mxu0 0
    %521 = vmatpush1.bf16.msra.mxu0 0
    %522 = vmatprep.subr.bf16.mxu0 0
    %523 = vmatpush1.bf16.msra.mxu0 0
    %524 = vmatprep.subr.bf16.mxu0 0
    %525 = vmatpush1.bf16.msra.mxu0 0
    %526 = vmatprep.subr.bf16.mxu0 0
    %527 = vmatpush1.bf16.msra.mxu0 0
    %528 = vmatprep.subr.bf16.mxu0 0
    %529 = vmatpush1.bf16.msra.mxu0 0
    %530 = vmatprep.subr.bf16.mxu0 0
    %531 = vmatpush1.bf16.msra.mxu0 0
    %532 = vmatprep.subr.bf16.mxu0 0
    %533 = vmatpush1.bf16.msra.mxu0 0
    %534 = vmatprep.subr.bf16.mxu0 0
    %535 = vmatpush1.bf16.msra.mxu0 0
    %536 = vmatprep.subr.bf16.mxu0 0
    %537 = vmatpush1.bf16.msra.mxu0 0
    %538 = vmatprep.subr.bf16.mxu0 0
    %539 = vmatpush1.bf16.msra.mxu0 0
    %540 = vmatprep.subr.bf16.mxu0 0
    %541 = vmatpush1.bf16.msra.mxu0 0
    %542 = vmatprep.mubr.bf16.mxu0 0
    %543 = vmatmul.mubr.bf16.gmra.mrb[0].mxu0 %v504
    %v544 = vpop.f32.mrb[0].mxu0
    %v545 = vadd.f32 0.0, %v544
    %v546 = vpop.f32.mrb[0].mxu0
    %v547 = vpop.f32.mrb[0].mxu0
    %v548 = vadd.f32 0.0, %v547
    %v549 = vpop.f32.mrb[0].mxu0
    %550 = vdwg.mxu0
    %v551 = vmul.f32 %v483, %v545
    %v552 = vmul.f32 %v486, %v548
    %v553 = vld [vmem:[#allocation4 + $0xc8] sm:$0xf]
    %v554 = vld [vmem:[#allocation4 + $0xcc] sm:$0xf]
    %v555 = vld [vmem:[#allocation4 + $0xd0] sm:$0xf]
    %v556 = vld [vmem:[#allocation4 + $0xd4] sm:$0xf]
    %v557 = vld [vmem:[#allocation4 + $0xd8] sm:$0xf]
    %v558 = vld [vmem:[#allocation4 + $0xdc] sm:$0xf]
    %v559 = vld [vmem:[#allocation4 + $0xe0] sm:$0xf]
    %v560 = vld [vmem:[#allocation4 + $0xe4] sm:$0xf]
    %v561 = vld [vmem:[#allocation4 + $0xe8] sm:$0xf]
    %v562 = vld [vmem:[#allocation4 + $0xec] sm:$0xf]
    %v563 = vld [vmem:[#allocation4 + $0xf0] sm:$0xf]
    %v564 = vld [vmem:[#allocation4 + $0xf4] sm:$0xf]
    %v565 = vld [vmem:[#allocation4 + $0xf8] sm:$0x3]
    %v566 = vpack.c.bf16 %v552, %v551
    %v580 = vunpack.c.l.b16 %v553
    %v581 = vunpack.c.l.b16 %v554
    %v582 = vunpack.c.l.b16 %v555
    %v583 = vunpack.c.l.b16 %v556
    %v584 = vunpack.c.l.b16 %v557
    %v585 = vunpack.c.l.b16 %v558
    %v586 = vunpack.c.l.b16 %v559
    %v587 = vunpack.c.l.b16 %v560
    %v588 = vunpack.c.l.b16 %v561
    %v589 = vunpack.c.l.b16 %v562
    %v590 = vunpack.c.l.b16 %v563
    %v591 = vunpack.c.l.b16 %v564
    %v592 = vunpack.c.l.b16 %v565
    %v593 = vpack.c.b16 %v581, %v580
    %v594 = vpack.c.b16 %v583, %v582
    %v595 = vpack.c.b16 %v585, %v584
    %v596 = vpack.c.b16 %v587, %v586
    %v597 = vpack.c.b16 %v589, %v588
    %v598 = vpack.c.b16 %v591, %v590
    %v599 = vpack.c.b16 %v592, %v592
    %vm606 = vcmask 818176
    %v608 = vsel %vm606, %v566, 0
    %v611 = vsel %vm79, %v599, 0
    %613 = vmatprep.subr.bf16.mxu0 0
    %614 = vmatpush1.bf16.msra.mxu0 %v593
    %615 = vmatprep.subr.bf16.mxu0 0
    %616 = vmatpush1.bf16.msra.mxu0 %v594
    %617 = vmatprep.subr.bf16.mxu0 0
    %618 = vmatpush1.bf16.msra.mxu0 %v595
    %619 = vmatprep.subr.bf16.mxu0 0
    %620 = vmatpush1.bf16.msra.mxu0 %v596
    %621 = vmatprep.subr.bf16.mxu0 0
    %622 = vmatpush1.bf16.msra.mxu0 %v597
    %623 = vmatprep.subr.bf16.mxu0 0
    %624 = vmatpush1.bf16.msra.mxu0 %v598
    %625 = vmatprep.subr.bf16.mxu0 0
    %626 = vmatpush1.bf16.msra.mxu0 %v611
    %627 = vmatprep.subr.bf16.mxu0 0
    %628 = vmatpush1.bf16.msra.mxu0 0
    %629 = vmatprep.subr.bf16.mxu0 0
    %630 = vmatpush1.bf16.msra.mxu0 0
    %631 = vmatprep.subr.bf16.mxu0 0
    %632 = vmatpush1.bf16.msra.mxu0 0
    %633 = vmatprep.subr.bf16.mxu0 0
    %634 = vmatpush1.bf16.msra.mxu0 0
    %635 = vmatprep.subr.bf16.mxu0 0
    %636 = vmatpush1.bf16.msra.mxu0 0
    %637 = vmatprep.subr.bf16.mxu0 0
    %638 = vmatpush1.bf16.msra.mxu0 0
    %639 = vmatprep.subr.bf16.mxu0 0
    %640 = vmatpush1.bf16.msra.mxu0 0
    %641 = vmatprep.subr.bf16.mxu0 0
    %642 = vmatpush1.bf16.msra.mxu0 0
    %643 = vmatprep.subr.bf16.mxu0 0
    %644 = vmatpush1.bf16.msra.mxu0 0
    %645 = vmatprep.mubr.bf16.mxu0 0
    %646 = vmatmul.mubr.bf16.gmra.mrb[0].mxu0 %v608
    %v647 = vpop.f32.mrb[0].mxu0
    %v648 = vadd.f32 0.0, %v647
    %v649 = vpop.f32.mrb[0].mxu0
    %v650 = vpop.f32.mrb[0].mxu0
    %v651 = vadd.f32 0.0, %v650
    %v652 = vpop.f32.mrb[0].mxu0
    %653 = vdwg.mxu0
    %v654 = vsel %vm502, %v648, -inf
    %655 = vmax.xlane.f32.xlu0 %v654
    %v656 = vpop.xlane.xlu0 %655
    %v657 = vsel %vm502, %v651, -inf
    %658 = vmax.xlane.f32.xlu0 %v657
    %v659 = vpop.xlane.xlu0 %658
    %v660 = vsub.f32 %v648, %v656
    %v661 = vsub.f32 %v651, %v659
    %v662 = vmul.f32 %v660, 1.442695
    %v663 = vpow.pop %v662
    %v664 = vmul.f32 %v661, 1.442695
    %v665 = vpow.pop %v664
    %v666 = vsel %vm502, %v663, 0.0
    %667 = vadd.xlane.f32.xlu0 %v666
    %v668 = vpop.xlane.xlu0 %667
    %v669 = vsel %vm502, %v665, 0.0
    %670 = vadd.xlane.f32.xlu0 %v669
    %v671 = vpop.xlane.xlu0 %670
    %v672 = vmul.f32 %v405, %v663
    %v673 = vmul.f32 %v408, %v665
    %v674 = vsel %vm502, %v672, 0.0
    %675 = vadd.xlane.f32.xlu0 %v674
    %v676 = vpop.xlane.xlu0 %675
    %v677 = vsel %vm502, %v673, 0.0
    %678 = vadd.xlane.f32.xlu0 %v677
    %v679 = vpop.xlane.xlu0 %678
    %v680 = vrcp.pop %v668
    %v681 = vrcp.pop %v671
    %v682 = vmul.f32 %v676, %v680
    %v683 = vmul.f32 %v679, %v681
    %v684 = vadd.f32 %v682, %v405
    %v685 = vadd.f32 %v683, %v408
    %688 = vrot.lane.b32.xlu0 %v684, 118
    %v689 = vpop.permute.xlu0 %688
    %690 = vrot.lane.b32.xlu0 %v685, 118
    %v691 = vpop.permute.xlu0 %690
    %vm694 = vcmask 7168
    %695 = vst.msk [vmem:[%s2] sm:$0xff] %vm694, %v689
    %696 = vst.msk [vmem:[%s2 + $0x8] sm:$0xff] %vm694, %v691
    // Predicated region
    $region18: #{tpu_custom_call.1} parent=1 // pred_check
      _
    $region19: #{tpu_custom_call.1} parent=1 // pred_check_branch
      %698 = sbr.rel (0) target = $region21
    $region20: #{tpu_custom_call.1} parent=1 // pred_region
      _
    $region21: #{tpu_custom_call.1} parent=1 // pred_fallthru
      _
    // Predicated region
    $region22: #{tpu_custom_call.1} parent=1 // pred_check
      _
    $region23: #{tpu_custom_call.1} parent=1 // pred_check_branch
      %700 = sbr.rel (0) target = $region25
    $region24: #{tpu_custom_call.1} parent=1 // pred_region
      _
    $region25: #{tpu_custom_call.1} parent=1 // pred_fallthru
      _
    %701 = vsyncpa [#allocation3], 1
    %702 = vsyncpa [#allocation5], 1

</llo_original>
